<compile_context>
chip_gen: v6e
topology: v6e:2x2x1
jax: 0.10.0
libtpu: 0.0.40
codegen_flags: <defaults>
</compile_context>

<pallas_src>
import jax
import jax.numpy as jnp
from jax.experimental import pallas as pl
from jax.experimental.pallas import tpu as pltpu

S_PAD = 8      # fc1 contraction dim padded 4 -> 8 (sublane-aligned MXU contraction)
A_SLAB = 128   # lane-dense fc2 / softmax compute width (pad lanes get a -1e30 bias)
OUT_PAD = 8    # HBM output width (>= action_dim); real actions live in lanes [0, A)


def _round_up(n, m):
    return ((n + m - 1) // m) * m


def _cdiv(a, b):
    return (a + b - 1) // b


def policy_kernel(x_ref, w1p_ref, b1_ref, w2p_ref, b2p_ref, out_ref):
    # fc1 + ReLU on the MXU (contraction K padded to 8; pad rows of w1 are zero).
    h = jnp.dot(x_ref[...], w1p_ref[...], preferred_element_type=jnp.float32) + b1_ref[...]
    h = jnp.maximum(h, 0.0)                                    # (TILE_B, H)

    # fc2 against the 128-lane padded weight slab; pad lanes carry a -1e30 bias.
    logits = jnp.dot(h, w2p_ref[...], preferred_element_type=jnp.float32) + b2p_ref[...]

    # Softmax over the 128-lane slab; exp() of the -1e30 pad lanes is exactly 0,
    # so the normalization over the real action lanes is exact.
    m = jnp.max(logits, axis=-1, keepdims=True)
    e = jnp.exp(logits - m)
    denom = jnp.sum(e, axis=-1, keepdims=True)
    probs = e * pl.reciprocal(denom, approx=False)             # exact: rows sum to 1

    # Only the first OUT_PAD lanes go back to HBM (lanes [A, OUT_PAD) are exactly 0).
    out_ref[...] = probs[:, :out_ref.shape[1]].astype(out_ref.dtype)


def policy_net_forward(x, w1p, b1, w2p, b2p, *, action_dim, tile_b=2048):
    """x: (B, state_dim). Padded params from init_params. Returns (B, action_dim) probs."""
    B, S = x.shape
    S_padded, H = w1p.shape
    assert S <= S_padded and w2p.shape[0] == H and action_dim <= OUT_PAD <= A_SLAB

    # Batch tile: multiple of 8 (f32 sublane), capped at tile_b. When the batch is big
    # enough, also cap so the grid has >= 2 steps (v7x: 2 TensorCores share the
    # "parallel" axis; with a single grid step one TC would idle).
    b8 = _round_up(B, 8)
    tb = min(tile_b, b8)
    if b8 >= 16:
        tb = min(tb, _round_up(_cdiv(b8, 2), 8))
    B_pad = _round_up(B, tb)

    # Pad batch to B_pad and state dim to S_padded (zeros; sliced off / zero-weighted).
    x_p = jnp.pad(x, ((0, B_pad - B), (0, S_padded - S)))

    grid = (B_pad // tb,)

    out_padded = pl.pallas_call(
        policy_kernel,
        out_shape=jax.ShapeDtypeStruct((B_pad, OUT_PAD), jnp.float32),
        grid_spec=pltpu.PrefetchScalarGridSpec(
            num_scalar_prefetch=0,
            grid=grid,
            in_specs=[
                pl.BlockSpec((tb, S_padded), lambda i: (i, 0)),   # x: tiled over batch
                pl.BlockSpec((S_padded, H), lambda i: (0, 0)),    # w1 (K-padded): VMEM-resident
                pl.BlockSpec((1, H), lambda i: (0, 0)),           # b1: VMEM-resident
                pl.BlockSpec((H, A_SLAB), lambda i: (0, 0)),      # w2 (lane-padded): VMEM-resident
                pl.BlockSpec((1, A_SLAB), lambda i: (0, 0)),      # b2 (lane-padded): VMEM-resident
            ],
            out_specs=pl.BlockSpec((tb, OUT_PAD), lambda i: (i, 0)),
        ),
        compiler_params=pltpu.CompilerParams(
            dimension_semantics=("parallel",)),                    # shard batch tiles across TCs
    )(x_p, w1p, b1, w2p, b2p)

    return out_padded[:B, :action_dim]


def init_params(key, state_dim, hidden_dim, action_dim):
    """torch.nn.Linear-style U(-1/sqrt(fan_in), 1/sqrt(fan_in)) init.

    Returns padded, kernel-ready params (built once, hoisted out of the forward):
      w1p: (S_PAD, hidden)   -- rows [state_dim, S_PAD) are zero
      b1 : (1, hidden)
      w2p: (hidden, A_SLAB)  -- cols [action_dim, A_SLAB) are zero
      b2p: (1, A_SLAB)       -- cols [action_dim, A_SLAB) are -1e30 (softmax pad)
    """
    k1, k2, k3, k4 = jax.random.split(key, 4)
    lim1 = 1.0 / jnp.sqrt(state_dim)
    lim2 = 1.0 / jnp.sqrt(hidden_dim)
    # Stored as (in, out): transpose of torch's (out, in) weight layout.
    w1 = jax.random.uniform(k1, (state_dim, hidden_dim), jnp.float32, -lim1, lim1)
    b1 = jax.random.uniform(k2, (1, hidden_dim), jnp.float32, -lim1, lim1)
    w2 = jax.random.uniform(k3, (hidden_dim, action_dim), jnp.float32, -lim2, lim2)
    b2 = jax.random.uniform(k4, (1, action_dim), jnp.float32, -lim2, lim2)

    w1p = jnp.zeros((S_PAD, hidden_dim), jnp.float32).at[:state_dim, :].set(w1)
    w2p = jnp.zeros((hidden_dim, A_SLAB), jnp.float32).at[:, :action_dim].set(w2)
    b2p = jnp.full((1, A_SLAB), -1e30, jnp.float32).at[:, :action_dim].set(b2)
    return w1p, b1, w2p, b2p


if __name__ == "__main__":
    # CartPole-v1: state_dim=4, action_dim=2, hidden_dim=128 (per the module's usage).
    batch, state_dim, hidden_dim, action_dim = 2, 4, 128, 2

    key = jax.random.PRNGKey(0)
    kx, kp = jax.random.split(key)
    x = jax.random.normal(kx, (batch, state_dim), jnp.float32)
    w1p, b1, w2p, b2p = init_params(kp, state_dim, hidden_dim, action_dim)

    probs = policy_net_forward(x, w1p, b1, w2p, b2p, action_dim=action_dim)
    jax.block_until_ready(probs)

    # Sanity check against a pure-JAX reference (same math as the PyTorch forward).
    w1 = w1p[:state_dim, :]
    w2 = w2p[:, :action_dim]
    b2 = b2p[:, :action_dim]
    h_ref = jnp.maximum(x @ w1 + b1, 0.0)
    ref = jax.nn.softmax(h_ref @ w2 + b2, axis=1)
    assert probs.shape == (batch, action_dim)
    assert jnp.allclose(probs, ref, atol=1e-5, rtol=1e-5)
    assert jnp.allclose(jnp.sum(probs, axis=1), 1.0, atol=1e-5)

    print("KERNEL_OK")
</pallas_src>

<mosaic_0001>
module attributes {stable_mosaic.version = 11 : i64} {
  func.func @policy_kernel(%arg0: i32, %arg1: memref<8x8xf32, #tpu.memory_space<vmem>>, %arg2: memref<8x128xf32, #tpu.memory_space<vmem>>, %arg3: memref<1x128xf32, #tpu.memory_space<vmem>>, %arg4: memref<128x128xf32, #tpu.memory_space<vmem>>, %arg5: memref<1x128xf32, #tpu.memory_space<vmem>>, %arg6: memref<8x8xf32, #tpu.memory_space<vmem>>) attributes {dimension_semantics = [#tpu.dimension_semantics<parallel>], iteration_bounds = array<i64: 1>, scalar_prefetch = 0 : i64, scratch_operands = 0 : i64, tpu.core_type = #tpu.core_type<tc>, window_params = [{transform_indices = @transform_0, window_bounds = array<i64: 8, 8>}, {pipeline_mode = #tpu.pipeline_mode<synchronous>, transform_indices = @transform_1, window_bounds = array<i64: 8, 128>}, {pipeline_mode = #tpu.pipeline_mode<synchronous>, transform_indices = @transform_2, window_bounds = array<i64: 1, 128>}, {pipeline_mode = #tpu.pipeline_mode<synchronous>, transform_indices = @transform_3, window_bounds = array<i64: 128, 128>}, {pipeline_mode = #tpu.pipeline_mode<synchronous>, transform_indices = @transform_4, window_bounds = array<i64: 1, 128>}, {transform_indices = @transform_5, window_bounds = array<i64: 8, 8>}]} {
    %c0 = arith.constant 0 : index
    %c0_0 = arith.constant 0 : index
    %0 = vector.load %arg1[%c0, %c0_0] : memref<8x8xf32, #tpu.memory_space<vmem>>, vector<8x8xf32>
    %c0_1 = arith.constant 0 : index
    %c0_2 = arith.constant 0 : index
    %1 = vector.load %arg2[%c0_1, %c0_2] : memref<8x128xf32, #tpu.memory_space<vmem>>, vector<8x128xf32>
    %cst = arith.constant dense<0.000000e+00> : vector<8x128xf32>
    %2 = tpu.matmul %0, %1, %cst {dimension_numbers = #tpu.dot_dimension_numbers<[1], [0], [0], [1], [0, 0, 1, 1], [], []>} : vector<8x8xf32>, vector<8x128xf32>, vector<8x128xf32> -> vector<8x128xf32>
    %c0_3 = arith.constant 0 : index
    %c0_4 = arith.constant 0 : index
    %3 = vector.load %arg3[%c0_3, %c0_4] : memref<1x128xf32, #tpu.memory_space<vmem>>, vector<1x128xf32>
    %4 = vector.broadcast %3 : vector<1x128xf32> to vector<8x128xf32>
    %5 = arith.addf %2, %4 : vector<8x128xf32>
    %cst_5 = arith.constant 0.000000e+00 : f32
    %6 = vector.broadcast %cst_5 : f32 to vector<8x128xf32>
    %7 = arith.maximumf %5, %6 : vector<8x128xf32>
    %c0_6 = arith.constant 0 : index
    %c0_7 = arith.constant 0 : index
    %8 = vector.load %arg4[%c0_6, %c0_7] : memref<128x128xf32, #tpu.memory_space<vmem>>, vector<128x128xf32>
    %cst_8 = arith.constant dense<0.000000e+00> : vector<8x128xf32>
    %9 = tpu.matmul %7, %8, %cst_8 {dimension_numbers = #tpu.dot_dimension_numbers<[1], [0], [0], [1], [0, 0, 1, 1], [], []>} : vector<8x128xf32>, vector<128x128xf32>, vector<8x128xf32> -> vector<8x128xf32>
    %c0_9 = arith.constant 0 : index
    %c0_10 = arith.constant 0 : index
    %10 = vector.load %arg5[%c0_9, %c0_10] : memref<1x128xf32, #tpu.memory_space<vmem>>, vector<1x128xf32>
    %11 = vector.broadcast %10 : vector<1x128xf32> to vector<8x128xf32>
    %12 = arith.addf %9, %11 : vector<8x128xf32>
    %cst_11 = arith.constant dense<0xFF800000> : vector<8xf32>
    %13 = vector.multi_reduction <maximumf>, %12, %cst_11 [1] : vector<8x128xf32> to vector<8xf32>
    %14 = vector.shape_cast %13 : vector<8xf32> to vector<8x1xf32>
    %15 = vector.broadcast %14 : vector<8x1xf32> to vector<8x128xf32>
    %16 = arith.subf %12, %15 : vector<8x128xf32>
    %17 = math.exp %16 : vector<8x128xf32>
    %cst_12 = arith.constant dense<0.000000e+00> : vector<8xf32>
    %18 = vector.multi_reduction <add>, %17, %cst_12 [1] : vector<8x128xf32> to vector<8xf32>
    %19 = vector.shape_cast %18 : vector<8xf32> to vector<8x1xf32>
    %20 = tpu.reciprocal %19 : vector<8x1xf32> -> vector<8x1xf32>
    %21 = vector.broadcast %20 : vector<8x1xf32> to vector<8x128xf32>
    %22 = arith.mulf %17, %21 : vector<8x128xf32>
    %23 = vector.extract_strided_slice %22 {offsets = [0, 0], sizes = [8, 8], strides = [1, 1]} : vector<8x128xf32> to vector<8x8xf32>
    %c0_13 = arith.constant 0 : index
    %c0_14 = arith.constant 0 : index
    %24 = vector.load %arg6[%c0_13, %c0_14] : memref<8x8xf32, #tpu.memory_space<vmem>>, vector<8x8xf32>
    tpu.vector_store %arg6[%c0_13, %c0_14], %23 {strides = array<i32>} : memref<8x8xf32, #tpu.memory_space<vmem>>, vector<8x8xf32>,
    return
  }
  func.func @transform_0(%arg0: i32) -> (i32, i32) {
    %c0_i32 = arith.constant 0 : i32
    %c0_i32_0 = arith.constant 0 : i32
    return %arg0, %c0_i32 : i32, i32
  }
  func.func @transform_1(%arg0: i32) -> (i32, i32) {
    %c0_i32 = arith.constant 0 : i32
    %c0_i32_0 = arith.constant 0 : i32
    %c0_i32_1 = arith.constant 0 : i32
    return %c0_i32, %c0_i32_0 : i32, i32
  }
  func.func @transform_2(%arg0: i32) -> (i32, i32) {
    %c0_i32 = arith.constant 0 : i32
    %c0_i32_0 = arith.constant 0 : i32
    %c0_i32_1 = arith.constant 0 : i32
    return %c0_i32, %c0_i32_0 : i32, i32
  }
  func.func @transform_3(%arg0: i32) -> (i32, i32) {
    %c0_i32 = arith.constant 0 : i32
    %c0_i32_0 = arith.constant 0 : i32
    %c0_i32_1 = arith.constant 0 : i32
    return %c0_i32, %c0_i32_0 : i32, i32
  }
  func.func @transform_4(%arg0: i32) -> (i32, i32) {
    %c0_i32 = arith.constant 0 : i32
    %c0_i32_0 = arith.constant 0 : i32
    %c0_i32_1 = arith.constant 0 : i32
    return %c0_i32, %c0_i32_0 : i32, i32
  }
  func.func @transform_5(%arg0: i32) -> (i32, i32) {
    %c0_i32 = arith.constant 0 : i32
    %c0_i32_0 = arith.constant 0 : i32
    return %arg0, %c0_i32 : i32, i32
  }
}

</mosaic_0001>

<llo_original>
// kernel: tpu_custom_call.1
$region0: #{tpu_custom_call.1}
  #allocation0 [shape = 'u32[]', space=smem, size = 0x4, offset = 0x4, fixed_abs, tag = 'smem constant byte address 0x4 - core index']
  #allocation1 [shape = 'u32[144,128]{1,0:T(1,128)}', space=vmem, size = 0x12000, scoped, tag = 'internal scratch']
  %s0 = inlined_call_operand.hbm [shape: f32[8,8], index: 0, kind: input, shape index: {}]
  %s1 = inlined_call_operand.hbm [shape: f32[8,128], index: 1, kind: input, shape index: {}]
  %s2 = inlined_call_operand.vmem [shape: f32[1,128], index: 2, kind: input, shape index: {}]
  %s3 = inlined_call_operand.hbm [shape: f32[128,128], index: 3, kind: input, shape index: {}]
  %s4 = inlined_call_operand.vmem [shape: f32[1,128], index: 4, kind: input, shape index: {}]
  %s5 = inlined_call_operand.hbm [shape: f32[8,8], index: 5, kind: output, shape index: {}]
  %s6 = sld [smem:[#allocation0]]
  $region42: #{tpu_custom_call.1} parent=0
    _
  %s8 = ssub.s32 1, %s6
  %s9 = scalar_select 0, %s8, %s6
  $region1: #{tpu_custom_call.1} parent=0
    #allocation2 [shape = 'u8[4096]{0}', space=vmem, size = 0x1000, scoped, tag = 'input window, operand 0, single buffered']
    #allocation3 [shape = 's32[1]{0}', space=sflag, size = 0x4, scoped, tag = 'scoped memory for tpu_custom_call.1']
    #allocation4 [shape = 's32[1]{0}', space=sflag, size = 0x4, scoped, tag = 'scoped memory for tpu_custom_call.1']
    #allocation5 [shape = 'u8[4096]{0}', space=vmem, size = 0x1000, scoped, tag = 'input window, operand 1, single buffered']
    #allocation6 [shape = 's32[1]{0}', space=sflag, size = 0x4, scoped, tag = 'scoped memory for tpu_custom_call.1']
    #allocation7 [shape = 'u8[65536]{0}', space=vmem, size = 0x10000, scoped, tag = 'input window, operand 3, single buffered']
    #allocation8 [shape = 'u8[4096]{0}', space=vmem, size = 0x1000, scoped, tag = 'output window, operand 0, single buffered']
    %10 = vsyncpa [#allocation3], 0
    %11 = vsyncpa [#allocation6], 0
    %12 = vsyncpa [#allocation4], 0
    // Predicated region
    $region2: #{tpu_custom_call.1} parent=1 // pred_check
      _
    $region3: #{tpu_custom_call.1} parent=1 // pred_check_branch
      %14 = sbr.rel (0) target = $region5
    $region4: #{tpu_custom_call.1} parent=1 // pred_region
      %s16 = ssub.s32 128, 128
      %17 = vsyncadd [#allocation3], %s16
      %s19 = sshll.u32 [#allocation2], 4
      %s20 = int_to_ptr.vmem [resolvable:$true] %s19
      %22 = dma.hbm_to_vmem [thread:$0]  %s0, 128, %s20, [#allocation3]
    $region5: #{tpu_custom_call.1} parent=1 // pred_fallthru
      _
    // Predicated region
    $region6: #{tpu_custom_call.1} parent=1 // pred_check
      _
    $region7: #{tpu_custom_call.1} parent=1 // pred_check_branch
      %24 = sbr.rel (0) target = $region9
    $region8: #{tpu_custom_call.1} parent=1 // pred_region
      %s26 = ssub.s32 128, 128
      %27 = vsyncadd [#allocation6], %s26
      %s29 = sshll.u32 [#allocation5], 4
      %s30 = int_to_ptr.vmem [resolvable:$true] %s29
      %32 = dma.hbm_to_vmem [thread:$0]  %s1, 128, %s30, [#allocation6]
    $region9: #{tpu_custom_call.1} parent=1 // pred_fallthru
      _
    // Predicated region
    $region10: #{tpu_custom_call.1} parent=1 // pred_check
      _
    $region11: #{tpu_custom_call.1} parent=1 // pred_check_branch
      %34 = sbr.rel (0) target = $region13
    $region12: #{tpu_custom_call.1} parent=1 // pred_region
      _
    $region13: #{tpu_custom_call.1} parent=1 // pred_fallthru
      _
    // Predicated region
    $region14: #{tpu_custom_call.1} parent=1 // pred_check
      _
    $region15: #{tpu_custom_call.1} parent=1 // pred_check_branch
      %36 = sbr.rel (0) target = $region17
    $region16: #{tpu_custom_call.1} parent=1 // pred_region
      %s38 = ssub.s32 2048, 2048
      %39 = vsyncadd [#allocation6], %s38
      %s40 = sshll.u32 [#allocation7], 4
      %s41 = int_to_ptr.vmem [resolvable:$true] %s40
      %46 = dma.hbm_to_vmem [thread:$0]  %s3, 2048, %s41, [#allocation6], 128, 128, 8
    $region17: #{tpu_custom_call.1} parent=1 // pred_fallthru
      _
    // Predicated region
    $region18: #{tpu_custom_call.1} parent=1 // pred_check
      _
    $region19: #{tpu_custom_call.1} parent=1 // pred_check_branch
      %48 = sbr.rel (0) target = $region21
    $region20: #{tpu_custom_call.1} parent=1 // pred_region
      _
    $region21: #{tpu_custom_call.1} parent=1 // pred_fallthru
      _
    // Predicated region
    $region22: #{tpu_custom_call.1} parent=1 // pred_check
      _
    $region23: #{tpu_custom_call.1} parent=1 // pred_check_branch
      %50 = sbr.rel (0) target = $region25
    $region24: #{tpu_custom_call.1} parent=1 // pred_region
      %51 = dma.done [#allocation3], 128
    $region25: #{tpu_custom_call.1} parent=1 // pred_fallthru
      _
    // Predicated region
    $region26: #{tpu_custom_call.1} parent=1 // pred_check
      _
    $region27: #{tpu_custom_call.1} parent=1 // pred_check_branch
      %53 = sbr.rel (0) target = $region29
    $region28: #{tpu_custom_call.1} parent=1 // pred_region
      %54 = dma.done [#allocation6], 128
    $region29: #{tpu_custom_call.1} parent=1 // pred_fallthru
      _
    // Predicated region
    $region30: #{tpu_custom_call.1} parent=1 // pred_check
      _
    $region31: #{tpu_custom_call.1} parent=1 // pred_check_branch
      %56 = sbr.rel (0) target = $region33
    $region32: #{tpu_custom_call.1} parent=1 // pred_region
      %57 = dma.done [#allocation6], 2048
    $region33: #{tpu_custom_call.1} parent=1 // pred_fallthru
      _
    %v58 = vld [vmem:[#allocation2] sm:$0xff]
    %v59 = vld [vmem:[#allocation5] sm:$0xff]
    %v60 = vld [vmem:[%s2] sm:$0x1]
    %v62 = vlaneseq
    %v63 = vshrl.u32 %v62, 7
    %v64 = vsub.s32 0, %v63
    %v65 = vrot.slane %v60, %v64
    %vm67 = vcmask 64512
    %v69 = vsel %vm67, %v58, 0
    %71 = vmatprep.subr.mxu0 0.0
    %72 = vmatpush1.msra.mxu0 0.0
    %73 = vmatprep.subr.mxu0 0.0
    %74 = vmatpush1.msra.mxu0 0.0
    %75 = vmatprep.subr.mxu0 0.0
    %76 = vmatpush1.msra.mxu0 0.0
    %77 = vmatprep.subr.mxu0 0.0
    %78 = vmatpush1.msra.mxu0 0.0
    %79 = vmatprep.subr.mxu0 0.0
    %80 = vmatpush1.msra.mxu0 0.0
    %81 = vmatprep.subr.mxu0 0.0
    %82 = vmatpush1.msra.mxu0 0.0
    %83 = vmatprep.subr.mxu0 0.0
    %84 = vmatpush1.msra.mxu0 0.0
    %85 = vmatprep.subr.mxu0 0.0
    %86 = vmatpush1.msra.mxu0 0.0
    %87 = vmatprep.subr.mxu0 0.0
    %88 = vmatpush1.msra.mxu0 0.0
    %89 = vmatprep.subr.mxu0 0.0
    %90 = vmatpush1.msra.mxu0 0.0
    %91 = vmatprep.subr.mxu0 0.0
    %92 = vmatpush1.msra.mxu0 0.0
    %93 = vmatprep.subr.mxu0 0.0
    %94 = vmatpush1.msra.mxu0 0.0
    %95 = vmatprep.subr.mxu0 0.0
    %96 = vmatpush1.msra.mxu0 0.0
    %97 = vmatprep.subr.mxu0 0.0
    %98 = vmatpush1.msra.mxu0 0.0
    %99 = vmatprep.subr.mxu0 0.0
    %100 = vmatpush1.msra.mxu0 0.0
    %101 = vmatprep.subr.mxu0 0.0
    %102 = vmatpush1.msra.mxu0 %v59
    %103 = vmatprep.subr.mxu0 0.0
    %104 = vmatpush2.msra.mxu0 0.0
    %105 = vmatprep.subr.mxu0 0.0
    %106 = vmatpush2.msra.mxu0 0.0
    %107 = vmatprep.subr.mxu0 0.0
    %108 = vmatpush2.msra.mxu0 0.0
    %109 = vmatprep.subr.mxu0 0.0
    %110 = vmatpush2.msra.mxu0 0.0
    %111 = vmatprep.subr.mxu0 0.0
    %112 = vmatpush2.msra.mxu0 0.0
    %113 = vmatprep.subr.mxu0 0.0
    %114 = vmatpush2.msra.mxu0 0.0
    %115 = vmatprep.subr.mxu0 0.0
    %116 = vmatpush2.msra.mxu0 0.0
    %117 = vmatprep.subr.mxu0 0.0
    %118 = vmatpush2.msra.mxu0 0.0
    %119 = vmatprep.subr.mxu0 0.0
    %120 = vmatpush2.msra.mxu0 0.0
    %121 = vmatprep.subr.mxu0 0.0
    %122 = vmatpush2.msra.mxu0 0.0
    %123 = vmatprep.subr.mxu0 0.0
    %124 = vmatpush2.msra.mxu0 0.0
    %125 = vmatprep.subr.mxu0 0.0
    %126 = vmatpush2.msra.mxu0 0.0
    %127 = vmatprep.subr.mxu0 0.0
    %128 = vmatpush2.msra.mxu0 0.0
    %129 = vmatprep.subr.mxu0 0.0
    %130 = vmatpush2.msra.mxu0 0.0
    %131 = vmatprep.subr.mxu0 0.0
    %132 = vmatpush2.msra.mxu0 0.0
    %133 = vmatprep.subr.mxu0 0.0
    %134 = vmatpush2.msra.mxu0 0.0
    %135 = vmatprep.mubr.f32.mxu0 0.0
    %136 = vmatmul.mubr.f32.gmra.mxu0 %v69
    %v137 = vpop.f32.mrf.mxu0
    %v138 = vadd.f32 %v65, %v137
    %v139 = vpop.f32.mrf.mxu0
    %140 = vdwg.mxu0
    %v141 = vmax.f32 %v138, 0.0
    %v142 = vld [vmem:[#allocation7] sm:$0xff]
    %v143 = vld [vmem:[#allocation7 + $0x8] sm:$0xff]
    %v144 = vld [vmem:[#allocation7 + $0x10] sm:$0xff]
    %v145 = vld [vmem:[#allocation7 + $0x18] sm:$0xff]
    %v146 = vld [vmem:[#allocation7 + $0x20] sm:$0xff]
    %v147 = vld [vmem:[#allocation7 + $0x28] sm:$0xff]
    %v148 = vld [vmem:[#allocation7 + $0x30] sm:$0xff]
    %v149 = vld [vmem:[#allocation7 + $0x38] sm:$0xff]
    %v150 = vld [vmem:[#allocation7 + $0x40] sm:$0xff]
    %v151 = vld [vmem:[#allocation7 + $0x48] sm:$0xff]
    %v152 = vld [vmem:[#allocation7 + $0x50] sm:$0xff]
    %v153 = vld [vmem:[#allocation7 + $0x58] sm:$0xff]
    %v154 = vld [vmem:[#allocation7 + $0x60] sm:$0xff]
    %v155 = vld [vmem:[#allocation7 + $0x68] sm:$0xff]
    %v156 = vld [vmem:[#allocation7 + $0x70] sm:$0xff]
    %v157 = vld [vmem:[#allocation7 + $0x78] sm:$0xff]
    %v158 = vld [vmem:[%s4] sm:$0x1]
    %v160 = vlaneseq
    %v161 = vshrl.u32 %v160, 7
    %v162 = vsub.s32 0, %v161
    %v163 = vrot.slane %v158, %v162
    %165 = vmatprep.subr.mxu0 0.0
    %166 = vmatpush1.msra.mxu0 %v157
    %167 = vmatprep.subr.mxu0 0.0
    %168 = vmatpush1.msra.mxu0 %v156
    %169 = vmatprep.subr.mxu0 0.0
    %170 = vmatpush1.msra.mxu0 %v155
    %171 = vmatprep.subr.mxu0 0.0
    %172 = vmatpush1.msra.mxu0 %v154
    %173 = vmatprep.subr.mxu0 0.0
    %174 = vmatpush1.msra.mxu0 %v153
    %175 = vmatprep.subr.mxu0 0.0
    %176 = vmatpush1.msra.mxu0 %v152
    %177 = vmatprep.subr.mxu0 0.0
    %178 = vmatpush1.msra.mxu0 %v151
    %179 = vmatprep.subr.mxu0 0.0
    %180 = vmatpush1.msra.mxu0 %v150
    %181 = vmatprep.subr.mxu0 0.0
    %182 = vmatpush1.msra.mxu0 %v149
    %183 = vmatprep.subr.mxu0 0.0
    %184 = vmatpush1.msra.mxu0 %v148
    %185 = vmatprep.subr.mxu0 0.0
    %186 = vmatpush1.msra.mxu0 %v147
    %187 = vmatprep.subr.mxu0 0.0
    %188 = vmatpush1.msra.mxu0 %v146
    %189 = vmatprep.subr.mxu0 0.0
    %190 = vmatpush1.msra.mxu0 %v145
    %191 = vmatprep.subr.mxu0 0.0
    %192 = vmatpush1.msra.mxu0 %v144
    %193 = vmatprep.subr.mxu0 0.0
    %194 = vmatpush1.msra.mxu0 %v143
    %195 = vmatprep.subr.mxu0 0.0
    %196 = vmatpush1.msra.mxu0 %v142
    %197 = vmatprep.subr.mxu0 0.0
    %198 = vmatpush2.msra.mxu0 0.0
    %199 = vmatprep.subr.mxu0 0.0
    %200 = vmatpush2.msra.mxu0 0.0
    %201 = vmatprep.subr.mxu0 0.0
    %202 = vmatpush2.msra.mxu0 0.0
    %203 = vmatprep.subr.mxu0 0.0
    %204 = vmatpush2.msra.mxu0 0.0
    %205 = vmatprep.subr.mxu0 0.0
    %206 = vmatpush2.msra.mxu0 0.0
    %207 = vmatprep.subr.mxu0 0.0
    %208 = vmatpush2.msra.mxu0 0.0
    %209 = vmatprep.subr.mxu0 0.0
    %210 = vmatpush2.msra.mxu0 0.0
    %211 = vmatprep.subr.mxu0 0.0
    %212 = vmatpush2.msra.mxu0 0.0
    %213 = vmatprep.subr.mxu0 0.0
    %214 = vmatpush2.msra.mxu0 0.0
    %215 = vmatprep.subr.mxu0 0.0
    %216 = vmatpush2.msra.mxu0 0.0
    %217 = vmatprep.subr.mxu0 0.0
    %218 = vmatpush2.msra.mxu0 0.0
    %219 = vmatprep.subr.mxu0 0.0
    %220 = vmatpush2.msra.mxu0 0.0
    %221 = vmatprep.subr.mxu0 0.0
    %222 = vmatpush2.msra.mxu0 0.0
    %223 = vmatprep.subr.mxu0 0.0
    %224 = vmatpush2.msra.mxu0 0.0
    %225 = vmatprep.subr.mxu0 0.0
    %226 = vmatpush2.msra.mxu0 0.0
    %227 = vmatprep.subr.mxu0 0.0
    %228 = vmatpush2.msra.mxu0 0.0
    %229 = vmatprep.mubr.f32.mxu0 0.0
    %230 = vmatmul.mubr.f32.gmra.mxu0 %v141
    %v231 = vpop.f32.mrf.mxu0
    %v232 = vadd.f32 %v163, %v231
    %v233 = vpop.f32.mrf.mxu0
    %234 = vdwg.mxu0
    %235 = vmax.xlane.f32.xlu0 %v232
    %v236 = vpop.xlane.xlu0 %235
    %v237 = vsub.f32 %v232, %v236
    %v238 = vmul.f32 %v237, 1.442695
    %v239 = vpow.pop %v238
    %240 = vadd.xlane.f32.xlu0 %v239
    %v241 = vpop.xlane.xlu0 %240
    %v242 = vrcp.pop %v241
    %v243 = vmul.f32 %v239, %v242
    %244 = vst.msk [vmem:[#allocation8] sm:$0xff] %vm67, %v243
    // Predicated region
    $region34: #{tpu_custom_call.1} parent=1 // pred_check
      _
    $region35: #{tpu_custom_call.1} parent=1 // pred_check_branch
      %246 = sbr.rel (0) target = $region37
    $region36: #{tpu_custom_call.1} parent=1 // pred_region
      %s248 = ssub.s32 128, 128
      %249 = vsyncadd [#allocation4], %s248
      %s251 = sshll.u32 [#allocation8], 4
      %s252 = int_to_ptr.vmem [resolvable:$true] %s251
      %254 = dma.vmem_to_hbm [thread:$0]  %s252, 128, %s5, [#allocation4]
    $region37: #{tpu_custom_call.1} parent=1 // pred_fallthru
      _
    // Predicated region
    $region38: #{tpu_custom_call.1} parent=1 // pred_check
      _
    $region39: #{tpu_custom_call.1} parent=1 // pred_check_branch
      %256 = sbr.rel (0) target = $region41
    $region40: #{tpu_custom_call.1} parent=1 // pred_region
      %257 = dma.done [#allocation4], 128
    $region41: #{tpu_custom_call.1} parent=1 // pred_fallthru
      _
    %258 = vsyncpa [#allocation3], 1
    %259 = vsyncpa [#allocation6], 1
    %260 = vsyncpa [#allocation4], 1

</llo_original>
